<compile_context>
chip_gen: v7x
topology: tpu7x:2x2x1
jax: 0.10.0
libtpu: 0.0.40
codegen_flags: <defaults>
</compile_context>

<pallas_src>
import functools

import jax
import jax.numpy as jnp
from jax.experimental import pallas as pl
from jax.experimental.pallas import tpu as pltpu


# ----------------------------------------------------------------------------
# Shared per-timestep recurrence (both directions fused).
#   h, c  : (B, 2H) f32, lanes [0:H] = forward, [H:2H] = reverse.
#   gx_t  : (B, 8H) f32 = x_t @ W_ih + bias, gate-major [i|f|o|g] columns,
#           reverse half already time-flipped by the wrapper.
#   whh   : (2H, 8H) bf16 block-diagonal recurrent weight.
# ----------------------------------------------------------------------------
def _lstm_step(h, c, gx_t, whh, *, H):
    H2 = 2 * H
    gates = jnp.dot(h.astype(whh.dtype), whh,
                    preferred_element_type=jnp.float32) + gx_t        # (B, 8H)
    sig = jax.nn.sigmoid(gates[:, 0:3 * H2])   # i, f, o in one wide EUP call
    i_g = sig[:, 0:H2]
    f_g = sig[:, H2:2 * H2]
    o_g = sig[:, 2 * H2:3 * H2]
    g_g = jnp.tanh(gates[:, 3 * H2:4 * H2])
    c_new = f_g * c + i_g * g_g
    h_new = o_g * jnp.tanh(c_new)
    return h_new, c_new


# ----------------------------------------------------------------------------
# Final-layer kernel: fused bi-LSTM recurrence + online max-pool + tanh + linear.
# Single grid step; time handled by an in-kernel fori_loop (unrolled).
# ----------------------------------------------------------------------------
def _bilstm_pool_head_kernel(gx_ref, whh_ref, h0_ref, c0_ref, wout_ref, bout_ref,
                             logit_ref, *, T, H):
    B = h0_ref.shape[0]
    whh = whh_ref[...]                 # hoisted once; resident for all steps

    def body(t, carry):
        h, c, mx = carry
        h, c = _lstm_step(h, c, gx_ref[t], whh, H=H)
        return h, c, jnp.maximum(mx, h)          # online max-pool over time

    init = (h0_ref[...], c0_ref[...],
            jnp.full((B, 2 * H), -jnp.inf, dtype=jnp.float32))
    _, _, pooled = jax.lax.fori_loop(0, T, body, init, unroll=(T <= 32))

    act = jnp.tanh(pooled)                                            # (B, 2H)
    logit_ref[...] = (jnp.dot(act, wout_ref[...],
                              preferred_element_type=jnp.float32)
                      + bout_ref[...])


# ----------------------------------------------------------------------------
# Intermediate-layer kernel (only needed when num_layers > 1): same fused
# recurrence but emits the full (T, B, 2H) sequence for the next layer.
# ----------------------------------------------------------------------------
def _bilstm_seq_kernel(gx_ref, whh_ref, h0_ref, c0_ref, y_ref, *, T, H):
    whh = whh_ref[...]

    def body(t, carry):
        h, c = carry
        h, c = _lstm_step(h, c, gx_ref[t], whh, H=H)
        y_ref[t, :, 0:H] = h[:, 0:H]                   # forward output at t
        y_ref[T - 1 - t, :, H:2 * H] = h[:, H:2 * H]   # reverse output at T-1-t
        return h, c

    jax.lax.fori_loop(0, T, body, (h0_ref[...], c0_ref[...]), unroll=(T <= 32))


# ----------------------------------------------------------------------------
# pallas_call wrappers (single grid step, everything resident in VMEM).
# ----------------------------------------------------------------------------
def bilstm_pool_head(gx, whh_bd, h0, c0, w_out, b_out, *, hidden_dim):
    T, B, _ = gx.shape
    H = hidden_dim
    C = w_out.shape[1]
    kernel = functools.partial(_bilstm_pool_head_kernel, T=T, H=H)
    return pl.pallas_call(
        kernel,
        out_shape=jax.ShapeDtypeStruct((B, C), jnp.float32),
        grid=(1,),
        in_specs=[
            pl.BlockSpec((T, B, 8 * H), lambda i: (0, 0, 0)),   # gx (bias folded)
            pl.BlockSpec((2 * H, 8 * H), lambda i: (0, 0)),     # whh block-diag bf16
            pl.BlockSpec((B, 2 * H), lambda i: (0, 0)),         # h0 stacked
            pl.BlockSpec((B, 2 * H), lambda i: (0, 0)),         # c0 stacked
            pl.BlockSpec((2 * H, C), lambda i: (0, 0)),         # hidden2label weight
            pl.BlockSpec((1, C), lambda i: (0, 0)),             # hidden2label bias
        ],
        out_specs=pl.BlockSpec((B, C), lambda i: (0, 0)),
        compiler_params=pltpu.CompilerParams(
            dimension_semantics=("arbitrary",)),
    )(gx, whh_bd, h0, c0, w_out, b_out)


def bilstm_seq(gx, whh_bd, h0, c0, *, hidden_dim):
    T, B, _ = gx.shape
    H = hidden_dim
    kernel = functools.partial(_bilstm_seq_kernel, T=T, H=H)
    return pl.pallas_call(
        kernel,
        out_shape=jax.ShapeDtypeStruct((T, B, 2 * H), jnp.float32),
        grid=(1,),
        in_specs=[
            pl.BlockSpec((T, B, 8 * H), lambda i: (0, 0, 0)),
            pl.BlockSpec((2 * H, 8 * H), lambda i: (0, 0)),
            pl.BlockSpec((B, 2 * H), lambda i: (0, 0)),
            pl.BlockSpec((B, 2 * H), lambda i: (0, 0)),
        ],
        out_specs=pl.BlockSpec((T, B, 2 * H), lambda i: (0, 0, 0)),
        compiler_params=pltpu.CompilerParams(
            dimension_semantics=("arbitrary",)),
    )(gx, whh_bd, h0, c0)


# ----------------------------------------------------------------------------
# Hoisted input projection (plain JAX): one big matmul for the whole sequence,
# bias folded in, reverse-direction columns time-flipped.
# ----------------------------------------------------------------------------
def _input_projection(x, layer_p, *, hidden_dim):
    H = hidden_dim
    gx = jnp.einsum('tbk,kg->tbg', x, layer_p["wih_gm"]) + layer_p["bias"]
    rev_lanes = (jnp.arange(8 * H) % (2 * H)) >= H        # rev half of each gate
    return jnp.where(rev_lanes, gx[::-1], gx)             # (T, B, 8H)


# ----------------------------------------------------------------------------
# Full forward pass.
# ----------------------------------------------------------------------------
def bilstm_1_forward(tokens, params, *, num_layers, hidden_dim):
    # tokens: (T, B) int32.
    # TODO(synk): embedding gather + eval-mode dropout kept as plain-JAX glue.
    x = params["embed_weight"][tokens].astype(jnp.float32)          # (T, B, D)
    for layer in range(num_layers):
        lp = params["layers"][layer]
        gx = _input_projection(x, lp, hidden_dim=hidden_dim)
        if layer + 1 < num_layers:
            x = bilstm_seq(gx, lp["whh_bd"], lp["h0"], lp["c0"],
                           hidden_dim=hidden_dim)                   # (T, B, 2H)
        else:
            return bilstm_pool_head(gx, lp["whh_bd"], lp["h0"], lp["c0"],
                                    params["w_out"], params["b_out"],
                                    hidden_dim=hidden_dim)          # (B, C)


# ----------------------------------------------------------------------------
# Deterministic parameter construction (synthetic, PyTorch-shaped, then packed
# into the fused gate-major / block-diagonal layout the kernel expects).
# ----------------------------------------------------------------------------
_GATE_PERM = (0, 1, 3, 2)   # PyTorch [i, f, g, o] -> kernel column order [i, f, o, g]


def _gate_major(a_f, a_r, H):
    """(..., 4H) fwd & rev gate blocks -> (..., 8H) columns
    laid out as [i_f i_r | f_f f_r | o_f o_r | g_f g_r] (each block H wide)."""
    lead = a_f.shape[:-1]
    perm = jnp.asarray(_GATE_PERM)
    af = a_f.reshape(lead + (4, H))[..., perm, :]
    ar = a_r.reshape(lead + (4, H))[..., perm, :]
    return jnp.stack([af, ar], axis=-2).reshape(lead + (8 * H,))


def make_params(key, *, V, D, H, C, num_layers, B):
    keys = jax.random.split(key, 8)
    params = {"embed_weight": jax.random.normal(keys[0], (V, D), jnp.float32)}

    scale = 1.0 / jnp.sqrt(jnp.float32(H))
    layer_keys = jax.random.split(keys[1], num_layers)
    # init_hidden: torch.randn(2*num_layers, B, H) — index 2*layer + direction.
    h0_all = jax.random.normal(keys[4], (2 * num_layers, B, H), jnp.float32)
    c0_all = jax.random.normal(keys[5], (2 * num_layers, B, H), jnp.float32)

    layers = []
    for layer in range(num_layers):
        in_dim = D if layer == 0 else 2 * H
        dks = jax.random.split(layer_keys[layer], 8)
        raw = []
        for d in range(2):
            w_ih = jax.random.normal(dks[4 * d + 0], (4 * H, in_dim), jnp.float32) * scale
            w_hh = jax.random.normal(dks[4 * d + 1], (4 * H, H), jnp.float32) * scale
            b_ih = jax.random.normal(dks[4 * d + 2], (4 * H,), jnp.float32) * scale
            b_hh = jax.random.normal(dks[4 * d + 3], (4 * H,), jnp.float32) * scale
            raw.append((w_ih, w_hh, b_ih + b_hh))
        (wih_f, whh_f, b_f), (wih_r, whh_r, b_r) = raw

        wih_gm = _gate_major(wih_f.T, wih_r.T, H)                      # (in_dim, 8H)
        zeros_h = jnp.zeros((H, 4 * H), jnp.float32)
        whh_bd = jnp.concatenate(
            [_gate_major(whh_f.T, zeros_h, H),     # rows 0:H  -> fwd h
             _gate_major(zeros_h, whh_r.T, H)],    # rows H:2H -> rev h
            axis=0)                                                    # (2H, 8H)
        bias_gm = _gate_major(b_f, b_r, H)                             # (8H,)

        layers.append(dict(
            wih_gm=wih_gm,
            whh_bd=whh_bd.astype(jnp.bfloat16),    # bf16 MXU path for recurrence
            bias=bias_gm,
            h0=jnp.concatenate([h0_all[2 * layer], h0_all[2 * layer + 1]], axis=-1),
            c0=jnp.concatenate([c0_all[2 * layer], c0_all[2 * layer + 1]], axis=-1),
        ))
    params["layers"] = layers

    # hidden2label: PyTorch Linear(2H, C) -> weight (C, 2H); stored transposed.
    w_lab = jax.random.normal(keys[2], (C, 2 * H), jnp.float32) / jnp.sqrt(jnp.float32(2 * H))
    b_lab = jax.random.normal(keys[3], (C,), jnp.float32) * 0.01
    params["w_out"] = w_lab.T
    params["b_out"] = b_lab.reshape(1, C)
    return params


if __name__ == "__main__":
    # Small, module-consistent shapes.
    V, D, H, C = 50, 32, 32, 5
    num_layers = 1
    T, B = 8, 2

    key = jax.random.PRNGKey(0)
    k_tok, k_par = jax.random.split(key)

    tokens = jax.random.randint(k_tok, (T, B), 0, V, dtype=jnp.int32)
    params = make_params(k_par, V=V, D=D, H=H, C=C, num_layers=num_layers, B=B)

    fwd = jax.jit(functools.partial(bilstm_1_forward,
                                    num_layers=num_layers, hidden_dim=H))
    logit = fwd(tokens, params)
    jax.block_until_ready(logit)
    assert logit.shape == (B, C)
    print("KERNEL_OK")
</pallas_src>

<mosaic_0001>
module attributes {stable_mosaic.version = 11 : i64} {
  func.func @_bilstm_pool_head_kernel(%arg0: i32, %arg1: memref<8x2x256xf32, #tpu.memory_space<vmem>>, %arg2: memref<64x256xbf16, #tpu.memory_space<vmem>>, %arg3: memref<2x64xf32, #tpu.memory_space<vmem>>, %arg4: memref<2x64xf32, #tpu.memory_space<vmem>>, %arg5: memref<64x5xf32, #tpu.memory_space<vmem>>, %arg6: memref<1x5xf32, #tpu.memory_space<vmem>>, %arg7: memref<2x5xf32, #tpu.memory_space<vmem>>) attributes {dimension_semantics = [#tpu.dimension_semantics<arbitrary>], iteration_bounds = array<i64: 1>, scalar_prefetch = 0 : i64, scratch_operands = 0 : i64, tpu.core_type = #tpu.core_type<tc>, window_params = [{pipeline_mode = #tpu.pipeline_mode<synchronous>, transform_indices = @transform_0, window_bounds = array<i64: 8, 2, 256>}, {pipeline_mode = #tpu.pipeline_mode<synchronous>, transform_indices = @transform_1, window_bounds = array<i64: 64, 256>}, {pipeline_mode = #tpu.pipeline_mode<synchronous>, transform_indices = @transform_2, window_bounds = array<i64: 2, 64>}, {pipeline_mode = #tpu.pipeline_mode<synchronous>, transform_indices = @transform_3, window_bounds = array<i64: 2, 64>}, {pipeline_mode = #tpu.pipeline_mode<synchronous>, transform_indices = @transform_4, window_bounds = array<i64: 64, 5>}, {pipeline_mode = #tpu.pipeline_mode<synchronous>, transform_indices = @transform_5, window_bounds = array<i64: 1, 5>}, {pipeline_mode = #tpu.pipeline_mode<synchronous>, transform_indices = @transform_6, window_bounds = array<i64: 2, 5>}]} {
    %c0 = arith.constant 0 : index
    %c0_0 = arith.constant 0 : index
    %0 = vector.load %arg2[%c0, %c0_0] : memref<64x256xbf16, #tpu.memory_space<vmem>>, vector<64x256xbf16>
    %c0_1 = arith.constant 0 : index
    %c0_2 = arith.constant 0 : index
    %1 = vector.load %arg3[%c0_1, %c0_2] : memref<2x64xf32, #tpu.memory_space<vmem>>, vector<2x64xf32>
    %c0_3 = arith.constant 0 : index
    %c0_4 = arith.constant 0 : index
    %2 = vector.load %arg4[%c0_3, %c0_4] : memref<2x64xf32, #tpu.memory_space<vmem>>, vector<2x64xf32>
    %cst = arith.constant 0xFF800000 : f32
    %3 = vector.broadcast %cst : f32 to vector<2x64xf32>
    %c0_i32 = arith.constant 0 : i32
    %4 = arith.index_cast %c0_i32 : i32 to index
    %c0_5 = arith.constant 0 : index
    %c0_6 = arith.constant 0 : index
    %5 = vector.load %arg1[%4, %c0_5, %c0_6] : memref<8x2x256xf32, #tpu.memory_space<vmem>>, vector<1x2x256xf32>
    %6 = vector.shape_cast %5 : vector<1x2x256xf32> to vector<2x256xf32>
    %7 = arith.truncf %1 : vector<2x64xf32> to vector<2x64xbf16>
    %cst_7 = arith.constant dense<0.000000e+00> : vector<2x256xf32>
    %8 = tpu.matmul %7, %0, %cst_7 {dimension_numbers = #tpu.dot_dimension_numbers<[1], [0], [0], [1], [0, 0, 1, 1], [], []>} : vector<2x64xbf16>, vector<64x256xbf16>, vector<2x256xf32> -> vector<2x256xf32>
    %9 = arith.addf %8, %6 : vector<2x256xf32>
    %10 = vector.extract_strided_slice %9 {offsets = [0, 0], sizes = [2, 192], strides = [1, 1]} : vector<2x256xf32> to vector<2x192xf32>
    %11 = arith.negf %10 : vector<2x192xf32>
    %12 = math.exp %11 : vector<2x192xf32>
    %cst_8 = arith.constant 1.000000e+00 : f32
    %13 = vector.broadcast %cst_8 : f32 to vector<2x192xf32>
    %14 = arith.addf %13, %12 : vector<2x192xf32>
    %15 = arith.divf %13, %14 : vector<2x192xf32>
    %16 = vector.extract_strided_slice %15 {offsets = [0, 0], sizes = [2, 64], strides = [1, 1]} : vector<2x192xf32> to vector<2x64xf32>
    %17 = vector.extract_strided_slice %15 {offsets = [0, 64], sizes = [2, 64], strides = [1, 1]} : vector<2x192xf32> to vector<2x64xf32>
    %18 = vector.extract_strided_slice %15 {offsets = [0, 128], sizes = [2, 64], strides = [1, 1]} : vector<2x192xf32> to vector<2x64xf32>
    %19 = vector.extract_strided_slice %9 {offsets = [0, 192], sizes = [2, 64], strides = [1, 1]} : vector<2x256xf32> to vector<2x64xf32>
    %20 = math.tanh %19 : vector<2x64xf32>
    %21 = arith.mulf %17, %2 : vector<2x64xf32>
    %22 = arith.mulf %16, %20 : vector<2x64xf32>
    %23 = arith.addf %21, %22 : vector<2x64xf32>
    %24 = math.tanh %23 : vector<2x64xf32>
    %25 = arith.mulf %18, %24 : vector<2x64xf32>
    %26 = arith.maximumf %3, %25 : vector<2x64xf32>
    %c1_i32 = arith.constant 1 : i32
    %27 = arith.index_cast %c1_i32 : i32 to index
    %c0_9 = arith.constant 0 : index
    %c0_10 = arith.constant 0 : index
    %28 = vector.load %arg1[%27, %c0_9, %c0_10] : memref<8x2x256xf32, #tpu.memory_space<vmem>>, vector<1x2x256xf32>
    %29 = vector.shape_cast %28 : vector<1x2x256xf32> to vector<2x256xf32>
    %30 = arith.truncf %25 : vector<2x64xf32> to vector<2x64xbf16>
    %cst_11 = arith.constant dense<0.000000e+00> : vector<2x256xf32>
    %31 = tpu.matmul %30, %0, %cst_11 {dimension_numbers = #tpu.dot_dimension_numbers<[1], [0], [0], [1], [0, 0, 1, 1], [], []>} : vector<2x64xbf16>, vector<64x256xbf16>, vector<2x256xf32> -> vector<2x256xf32>
    %32 = arith.addf %31, %29 : vector<2x256xf32>
    %33 = vector.extract_strided_slice %32 {offsets = [0, 0], sizes = [2, 192], strides = [1, 1]} : vector<2x256xf32> to vector<2x192xf32>
    %34 = arith.negf %33 : vector<2x192xf32>
    %35 = math.exp %34 : vector<2x192xf32>
    %cst_12 = arith.constant 1.000000e+00 : f32
    %36 = vector.broadcast %cst_12 : f32 to vector<2x192xf32>
    %37 = arith.addf %36, %35 : vector<2x192xf32>
    %38 = arith.divf %36, %37 : vector<2x192xf32>
    %39 = vector.extract_strided_slice %38 {offsets = [0, 0], sizes = [2, 64], strides = [1, 1]} : vector<2x192xf32> to vector<2x64xf32>
    %40 = vector.extract_strided_slice %38 {offsets = [0, 64], sizes = [2, 64], strides = [1, 1]} : vector<2x192xf32> to vector<2x64xf32>
    %41 = vector.extract_strided_slice %38 {offsets = [0, 128], sizes = [2, 64], strides = [1, 1]} : vector<2x192xf32> to vector<2x64xf32>
    %42 = vector.extract_strided_slice %32 {offsets = [0, 192], sizes = [2, 64], strides = [1, 1]} : vector<2x256xf32> to vector<2x64xf32>
    %43 = math.tanh %42 : vector<2x64xf32>
    %44 = arith.mulf %40, %23 : vector<2x64xf32>
    %45 = arith.mulf %39, %43 : vector<2x64xf32>
    %46 = arith.addf %44, %45 : vector<2x64xf32>
    %47 = math.tanh %46 : vector<2x64xf32>
    %48 = arith.mulf %41, %47 : vector<2x64xf32>
    %49 = arith.maximumf %26, %48 : vector<2x64xf32>
    %c2_i32 = arith.constant 2 : i32
    %50 = arith.index_cast %c2_i32 : i32 to index
    %c0_13 = arith.constant 0 : index
    %c0_14 = arith.constant 0 : index
    %51 = vector.load %arg1[%50, %c0_13, %c0_14] : memref<8x2x256xf32, #tpu.memory_space<vmem>>, vector<1x2x256xf32>
    %52 = vector.shape_cast %51 : vector<1x2x256xf32> to vector<2x256xf32>
    %53 = arith.truncf %48 : vector<2x64xf32> to vector<2x64xbf16>
    %cst_15 = arith.constant dense<0.000000e+00> : vector<2x256xf32>
    %54 = tpu.matmul %53, %0, %cst_15 {dimension_numbers = #tpu.dot_dimension_numbers<[1], [0], [0], [1], [0, 0, 1, 1], [], []>} : vector<2x64xbf16>, vector<64x256xbf16>, vector<2x256xf32> -> vector<2x256xf32>
    %55 = arith.addf %54, %52 : vector<2x256xf32>
    %56 = vector.extract_strided_slice %55 {offsets = [0, 0], sizes = [2, 192], strides = [1, 1]} : vector<2x256xf32> to vector<2x192xf32>
    %57 = arith.negf %56 : vector<2x192xf32>
    %58 = math.exp %57 : vector<2x192xf32>
    %cst_16 = arith.constant 1.000000e+00 : f32
    %59 = vector.broadcast %cst_16 : f32 to vector<2x192xf32>
    %60 = arith.addf %59, %58 : vector<2x192xf32>
    %61 = arith.divf %59, %60 : vector<2x192xf32>
    %62 = vector.extract_strided_slice %61 {offsets = [0, 0], sizes = [2, 64], strides = [1, 1]} : vector<2x192xf32> to vector<2x64xf32>
    %63 = vector.extract_strided_slice %61 {offsets = [0, 64], sizes = [2, 64], strides = [1, 1]} : vector<2x192xf32> to vector<2x64xf32>
    %64 = vector.extract_strided_slice %61 {offsets = [0, 128], sizes = [2, 64], strides = [1, 1]} : vector<2x192xf32> to vector<2x64xf32>
    %65 = vector.extract_strided_slice %55 {offsets = [0, 192], sizes = [2, 64], strides = [1, 1]} : vector<2x256xf32> to vector<2x64xf32>
    %66 = math.tanh %65 : vector<2x64xf32>
    %67 = arith.mulf %63, %46 : vector<2x64xf32>
    %68 = arith.mulf %62, %66 : vector<2x64xf32>
    %69 = arith.addf %67, %68 : vector<2x64xf32>
    %70 = math.tanh %69 : vector<2x64xf32>
    %71 = arith.mulf %64, %70 : vector<2x64xf32>
    %72 = arith.maximumf %49, %71 : vector<2x64xf32>
    %c3_i32 = arith.constant 3 : i32
    %73 = arith.index_cast %c3_i32 : i32 to index
    %c0_17 = arith.constant 0 : index
    %c0_18 = arith.constant 0 : index
    %74 = vector.load %arg1[%73, %c0_17, %c0_18] : memref<8x2x256xf32, #tpu.memory_space<vmem>>, vector<1x2x256xf32>
    %75 = vector.shape_cast %74 : vector<1x2x256xf32> to vector<2x256xf32>
    %76 = arith.truncf %71 : vector<2x64xf32> to vector<2x64xbf16>
    %cst_19 = arith.constant dense<0.000000e+00> : vector<2x256xf32>
    %77 = tpu.matmul %76, %0, %cst_19 {dimension_numbers = #tpu.dot_dimension_numbers<[1], [0], [0], [1], [0, 0, 1, 1], [], []>} : vector<2x64xbf16>, vector<64x256xbf16>, vector<2x256xf32> -> vector<2x256xf32>
    %78 = arith.addf %77, %75 : vector<2x256xf32>
    %79 = vector.extract_strided_slice %78 {offsets = [0, 0], sizes = [2, 192], strides = [1, 1]} : vector<2x256xf32> to vector<2x192xf32>
    %80 = arith.negf %79 : vector<2x192xf32>
    %81 = math.exp %80 : vector<2x192xf32>
    %cst_20 = arith.constant 1.000000e+00 : f32
    %82 = vector.broadcast %cst_20 : f32 to vector<2x192xf32>
    %83 = arith.addf %82, %81 : vector<2x192xf32>
    %84 = arith.divf %82, %83 : vector<2x192xf32>
    %85 = vector.extract_strided_slice %84 {offsets = [0, 0], sizes = [2, 64], strides = [1, 1]} : vector<2x192xf32> to vector<2x64xf32>
    %86 = vector.extract_strided_slice %84 {offsets = [0, 64], sizes = [2, 64], strides = [1, 1]} : vector<2x192xf32> to vector<2x64xf32>
    %87 = vector.extract_strided_slice %84 {offsets = [0, 128], sizes = [2, 64], strides = [1, 1]} : vector<2x192xf32> to vector<2x64xf32>
    %88 = vector.extract_strided_slice %78 {offsets = [0, 192], sizes = [2, 64], strides = [1, 1]} : vector<2x256xf32> to vector<2x64xf32>
    %89 = math.tanh %88 : vector<2x64xf32>
    %90 = arith.mulf %86, %69 : vector<2x64xf32>
    %91 = arith.mulf %85, %89 : vector<2x64xf32>
    %92 = arith.addf %90, %91 : vector<2x64xf32>
    %93 = math.tanh %92 : vector<2x64xf32>
    %94 = arith.mulf %87, %93 : vector<2x64xf32>
    %95 = arith.maximumf %72, %94 : vector<2x64xf32>
    %c4_i32 = arith.constant 4 : i32
    %96 = arith.index_cast %c4_i32 : i32 to index
    %c0_21 = arith.constant 0 : index
    %c0_22 = arith.constant 0 : index
    %97 = vector.load %arg1[%96, %c0_21, %c0_22] : memref<8x2x256xf32, #tpu.memory_space<vmem>>, vector<1x2x256xf32>
    %98 = vector.shape_cast %97 : vector<1x2x256xf32> to vector<2x256xf32>
    %99 = arith.truncf %94 : vector<2x64xf32> to vector<2x64xbf16>
    %cst_23 = arith.constant dense<0.000000e+00> : vector<2x256xf32>
    %100 = tpu.matmul %99, %0, %cst_23 {dimension_numbers = #tpu.dot_dimension_numbers<[1], [0], [0], [1], [0, 0, 1, 1], [], []>} : vector<2x64xbf16>, vector<64x256xbf16>, vector<2x256xf32> -> vector<2x256xf32>
    %101 = arith.addf %100, %98 : vector<2x256xf32>
    %102 = vector.extract_strided_slice %101 {offsets = [0, 0], sizes = [2, 192], strides = [1, 1]} : vector<2x256xf32> to vector<2x192xf32>
    %103 = arith.negf %102 : vector<2x192xf32>
    %104 = math.exp %103 : vector<2x192xf32>
    %cst_24 = arith.constant 1.000000e+00 : f32
    %105 = vector.broadcast %cst_24 : f32 to vector<2x192xf32>
    %106 = arith.addf %105, %104 : vector<2x192xf32>
    %107 = arith.divf %105, %106 : vector<2x192xf32>
    %108 = vector.extract_strided_slice %107 {offsets = [0, 0], sizes = [2, 64], strides = [1, 1]} : vector<2x192xf32> to vector<2x64xf32>
    %109 = vector.extract_strided_slice %107 {offsets = [0, 64], sizes = [2, 64], strides = [1, 1]} : vector<2x192xf32> to vector<2x64xf32>
    %110 = vector.extract_strided_slice %107 {offsets = [0, 128], sizes = [2, 64], strides = [1, 1]} : vector<2x192xf32> to vector<2x64xf32>
    %111 = vector.extract_strided_slice %101 {offsets = [0, 192], sizes = [2, 64], strides = [1, 1]} : vector<2x256xf32> to vector<2x64xf32>
    %112 = math.tanh %111 : vector<2x64xf32>
    %113 = arith.mulf %109, %92 : vector<2x64xf32>
    %114 = arith.mulf %108, %112 : vector<2x64xf32>
    %115 = arith.addf %113, %114 : vector<2x64xf32>
    %116 = math.tanh %115 : vector<2x64xf32>
    %117 = arith.mulf %110, %116 : vector<2x64xf32>
    %118 = arith.maximumf %95, %117 : vector<2x64xf32>
    %c5_i32 = arith.constant 5 : i32
    %119 = arith.index_cast %c5_i32 : i32 to index
    %c0_25 = arith.constant 0 : index
    %c0_26 = arith.constant 0 : index
    %120 = vector.load %arg1[%119, %c0_25, %c0_26] : memref<8x2x256xf32, #tpu.memory_space<vmem>>, vector<1x2x256xf32>
    %121 = vector.shape_cast %120 : vector<1x2x256xf32> to vector<2x256xf32>
    %122 = arith.truncf %117 : vector<2x64xf32> to vector<2x64xbf16>
    %cst_27 = arith.constant dense<0.000000e+00> : vector<2x256xf32>
    %123 = tpu.matmul %122, %0, %cst_27 {dimension_numbers = #tpu.dot_dimension_numbers<[1], [0], [0], [1], [0, 0, 1, 1], [], []>} : vector<2x64xbf16>, vector<64x256xbf16>, vector<2x256xf32> -> vector<2x256xf32>
    %124 = arith.addf %123, %121 : vector<2x256xf32>
    %125 = vector.extract_strided_slice %124 {offsets = [0, 0], sizes = [2, 192], strides = [1, 1]} : vector<2x256xf32> to vector<2x192xf32>
    %126 = arith.negf %125 : vector<2x192xf32>
    %127 = math.exp %126 : vector<2x192xf32>
    %cst_28 = arith.constant 1.000000e+00 : f32
    %128 = vector.broadcast %cst_28 : f32 to vector<2x192xf32>
    %129 = arith.addf %128, %127 : vector<2x192xf32>
    %130 = arith.divf %128, %129 : vector<2x192xf32>
    %131 = vector.extract_strided_slice %130 {offsets = [0, 0], sizes = [2, 64], strides = [1, 1]} : vector<2x192xf32> to vector<2x64xf32>
    %132 = vector.extract_strided_slice %130 {offsets = [0, 64], sizes = [2, 64], strides = [1, 1]} : vector<2x192xf32> to vector<2x64xf32>
    %133 = vector.extract_strided_slice %130 {offsets = [0, 128], sizes = [2, 64], strides = [1, 1]} : vector<2x192xf32> to vector<2x64xf32>
    %134 = vector.extract_strided_slice %124 {offsets = [0, 192], sizes = [2, 64], strides = [1, 1]} : vector<2x256xf32> to vector<2x64xf32>
    %135 = math.tanh %134 : vector<2x64xf32>
    %136 = arith.mulf %132, %115 : vector<2x64xf32>
    %137 = arith.mulf %131, %135 : vector<2x64xf32>
    %138 = arith.addf %136, %137 : vector<2x64xf32>
    %139 = math.tanh %138 : vector<2x64xf32>
    %140 = arith.mulf %133, %139 : vector<2x64xf32>
    %141 = arith.maximumf %118, %140 : vector<2x64xf32>
    %c6_i32 = arith.constant 6 : i32
    %142 = arith.index_cast %c6_i32 : i32 to index
    %c0_29 = arith.constant 0 : index
    %c0_30 = arith.constant 0 : index
    %143 = vector.load %arg1[%142, %c0_29, %c0_30] : memref<8x2x256xf32, #tpu.memory_space<vmem>>, vector<1x2x256xf32>
    %144 = vector.shape_cast %143 : vector<1x2x256xf32> to vector<2x256xf32>
    %145 = arith.truncf %140 : vector<2x64xf32> to vector<2x64xbf16>
    %cst_31 = arith.constant dense<0.000000e+00> : vector<2x256xf32>
    %146 = tpu.matmul %145, %0, %cst_31 {dimension_numbers = #tpu.dot_dimension_numbers<[1], [0], [0], [1], [0, 0, 1, 1], [], []>} : vector<2x64xbf16>, vector<64x256xbf16>, vector<2x256xf32> -> vector<2x256xf32>
    %147 = arith.addf %146, %144 : vector<2x256xf32>
    %148 = vector.extract_strided_slice %147 {offsets = [0, 0], sizes = [2, 192], strides = [1, 1]} : vector<2x256xf32> to vector<2x192xf32>
    %149 = arith.negf %148 : vector<2x192xf32>
    %150 = math.exp %149 : vector<2x192xf32>
    %cst_32 = arith.constant 1.000000e+00 : f32
    %151 = vector.broadcast %cst_32 : f32 to vector<2x192xf32>
    %152 = arith.addf %151, %150 : vector<2x192xf32>
    %153 = arith.divf %151, %152 : vector<2x192xf32>
    %154 = vector.extract_strided_slice %153 {offsets = [0, 0], sizes = [2, 64], strides = [1, 1]} : vector<2x192xf32> to vector<2x64xf32>
    %155 = vector.extract_strided_slice %153 {offsets = [0, 64], sizes = [2, 64], strides = [1, 1]} : vector<2x192xf32> to vector<2x64xf32>
    %156 = vector.extract_strided_slice %153 {offsets = [0, 128], sizes = [2, 64], strides = [1, 1]} : vector<2x192xf32> to vector<2x64xf32>
    %157 = vector.extract_strided_slice %147 {offsets = [0, 192], sizes = [2, 64], strides = [1, 1]} : vector<2x256xf32> to vector<2x64xf32>
    %158 = math.tanh %157 : vector<2x64xf32>
    %159 = arith.mulf %155, %138 : vector<2x64xf32>
    %160 = arith.mulf %154, %158 : vector<2x64xf32>
    %161 = arith.addf %159, %160 : vector<2x64xf32>
    %162 = math.tanh %161 : vector<2x64xf32>
    %163 = arith.mulf %156, %162 : vector<2x64xf32>
    %164 = arith.maximumf %141, %163 : vector<2x64xf32>
    %c7_i32 = arith.constant 7 : i32
    %165 = arith.index_cast %c7_i32 : i32 to index
    %c0_33 = arith.constant 0 : index
    %c0_34 = arith.constant 0 : index
    %166 = vector.load %arg1[%165, %c0_33, %c0_34] : memref<8x2x256xf32, #tpu.memory_space<vmem>>, vector<1x2x256xf32>
    %167 = vector.shape_cast %166 : vector<1x2x256xf32> to vector<2x256xf32>
    %168 = arith.truncf %163 : vector<2x64xf32> to vector<2x64xbf16>
    %cst_35 = arith.constant dense<0.000000e+00> : vector<2x256xf32>
    %169 = tpu.matmul %168, %0, %cst_35 {dimension_numbers = #tpu.dot_dimension_numbers<[1], [0], [0], [1], [0, 0, 1, 1], [], []>} : vector<2x64xbf16>, vector<64x256xbf16>, vector<2x256xf32> -> vector<2x256xf32>
    %170 = arith.addf %169, %167 : vector<2x256xf32>
    %171 = vector.extract_strided_slice %170 {offsets = [0, 0], sizes = [2, 192], strides = [1, 1]} : vector<2x256xf32> to vector<2x192xf32>
    %172 = arith.negf %171 : vector<2x192xf32>
    %173 = math.exp %172 : vector<2x192xf32>
    %cst_36 = arith.constant 1.000000e+00 : f32
    %174 = vector.broadcast %cst_36 : f32 to vector<2x192xf32>
    %175 = arith.addf %174, %173 : vector<2x192xf32>
    %176 = arith.divf %174, %175 : vector<2x192xf32>
    %177 = vector.extract_strided_slice %176 {offsets = [0, 0], sizes = [2, 64], strides = [1, 1]} : vector<2x192xf32> to vector<2x64xf32>
    %178 = vector.extract_strided_slice %176 {offsets = [0, 64], sizes = [2, 64], strides = [1, 1]} : vector<2x192xf32> to vector<2x64xf32>
    %179 = vector.extract_strided_slice %176 {offsets = [0, 128], sizes = [2, 64], strides = [1, 1]} : vector<2x192xf32> to vector<2x64xf32>
    %180 = vector.extract_strided_slice %170 {offsets = [0, 192], sizes = [2, 64], strides = [1, 1]} : vector<2x256xf32> to vector<2x64xf32>
    %181 = math.tanh %180 : vector<2x64xf32>
    %182 = arith.mulf %178, %161 : vector<2x64xf32>
    %183 = arith.mulf %177, %181 : vector<2x64xf32>
    %184 = arith.addf %182, %183 : vector<2x64xf32>
    %185 = math.tanh %184 : vector<2x64xf32>
    %186 = arith.mulf %179, %185 : vector<2x64xf32>
    %187 = arith.maximumf %164, %186 : vector<2x64xf32>
    %c8_i32 = arith.constant 8 : i32
    %188 = math.tanh %187 : vector<2x64xf32>
    %c0_37 = arith.constant 0 : index
    %c0_38 = arith.constant 0 : index
    %189 = vector.load %arg5[%c0_37, %c0_38] : memref<64x5xf32, #tpu.memory_space<vmem>>, vector<64x5xf32>
    %cst_39 = arith.constant dense<0.000000e+00> : vector<2x5xf32>
    %190 = tpu.matmul %188, %189, %cst_39 {dimension_numbers = #tpu.dot_dimension_numbers<[1], [0], [0], [1], [0, 0, 1, 1], [], []>} : vector<2x64xf32>, vector<64x5xf32>, vector<2x5xf32> -> vector<2x5xf32>
    %c0_40 = arith.constant 0 : index
    %c0_41 = arith.constant 0 : index
    %191 = vector.load %arg6[%c0_40, %c0_41] : memref<1x5xf32, #tpu.memory_space<vmem>>, vector<1x5xf32>
    %192 = vector.broadcast %191 : vector<1x5xf32> to vector<2x5xf32>
    %193 = arith.addf %190, %192 : vector<2x5xf32>
    %c0_42 = arith.constant 0 : index
    %c0_43 = arith.constant 0 : index
    %194 = vector.load %arg7[%c0_42, %c0_43] : memref<2x5xf32, #tpu.memory_space<vmem>>, vector<2x5xf32>
    tpu.vector_store %arg7[%c0_42, %c0_43], %193 {strides = array<i32>} : memref<2x5xf32, #tpu.memory_space<vmem>>, vector<2x5xf32>,
    return
  }
  func.func @transform_0(%arg0: i32) -> (i32, i32, i32) {
    %c0_i32 = arith.constant 0 : i32
    %c0_i32_0 = arith.constant 0 : i32
    %c0_i32_1 = arith.constant 0 : i32
    %c0_i32_2 = arith.constant 0 : i32
    return %c0_i32, %c0_i32_0, %c0_i32_1 : i32, i32, i32
  }
  func.func @transform_1(%arg0: i32) -> (i32, i32) {
    %c0_i32 = arith.constant 0 : i32
    %c0_i32_0 = arith.constant 0 : i32
    %c0_i32_1 = arith.constant 0 : i32
    return %c0_i32, %c0_i32_0 : i32, i32
  }
  func.func @transform_2(%arg0: i32) -> (i32, i32) {
    %c0_i32 = arith.constant 0 : i32
    %c0_i32_0 = arith.constant 0 : i32
    %c0_i32_1 = arith.constant 0 : i32
    return %c0_i32, %c0_i32_0 : i32, i32
  }
  func.func @transform_3(%arg0: i32) -> (i32, i32) {
    %c0_i32 = arith.constant 0 : i32
    %c0_i32_0 = arith.constant 0 : i32
    %c0_i32_1 = arith.constant 0 : i32
    return %c0_i32, %c0_i32_0 : i32, i32
  }
  func.func @transform_4(%arg0: i32) -> (i32, i32) {
    %c0_i32 = arith.constant 0 : i32
    %c0_i32_0 = arith.constant 0 : i32
    %c0_i32_1 = arith.constant 0 : i32
    return %c0_i32, %c0_i32_0 : i32, i32
  }
  func.func @transform_5(%arg0: i32) -> (i32, i32) {
    %c0_i32 = arith.constant 0 : i32
    %c0_i32_0 = arith.constant 0 : i32
    %c0_i32_1 = arith.constant 0 : i32
    return %c0_i32, %c0_i32_0 : i32, i32
  }
  func.func @transform_6(%arg0: i32) -> (i32, i32) {
    %c0_i32 = arith.constant 0 : i32
    %c0_i32_0 = arith.constant 0 : i32
    %c0_i32_1 = arith.constant 0 : i32
    return %c0_i32, %c0_i32_0 : i32, i32
  }
}

</mosaic_0001>

<llo_original>
// kernel: bilstm_1_forward.1
$region0: #{bilstm_1_forward.1}
  #allocation0 [shape = 'u32[]', space=smem, size = 0x4, offset = 0x4, fixed_abs, tag = 'smem constant byte address 0x4 - core index']
  #allocation1 [shape = 'u32[144,128]{1,0:T(1,128)}', space=vmem, size = 0x12000, scoped, tag = 'internal scratch']
  %s0 = inlined_call_operand.vmem [shape: f32[8,2,256], index: 0, kind: input, shape index: {}]
  %s1 = inlined_call_operand.vmem [shape: bf16[64,256], index: 1, kind: input, shape index: {}]
  %s2 = inlined_call_operand.vmem [shape: f32[2,64], index: 2, kind: input, shape index: {}]
  %s3 = inlined_call_operand.vmem [shape: f32[2,64], index: 3, kind: input, shape index: {}]
  %s4 = inlined_call_operand.vmem [shape: f32[64,5], index: 4, kind: input, shape index: {}]
  %s5 = inlined_call_operand.vmem [shape: f32[1,5], index: 5, kind: input, shape index: {}]
  %s6 = inlined_call_operand.hbm [shape: f32[2,5], index: 6, kind: output, shape index: {}]
  %s7 = sld [smem:[#allocation0]]
  $region34: #{bilstm_1_forward.1} parent=0
    _
  %s9 = ssub.s32 1, %s7
  %s10 = scalar_select 0, %s9, %s7
  $region1: #{bilstm_1_forward.1} parent=0
    #allocation2 [shape = 'u8[1024]{0}', space=vmem, size = 0x400, scoped, tag = 'output window, operand 0, single buffered']
    #allocation3 [shape = 's32[1]{0}', space=sflag, size = 0x4, scoped, tag = 'scoped memory for bilstm_1_forward.1']
    %11 = vsyncpa [#allocation3], 0
    // Predicated region
    $region2: #{bilstm_1_forward.1} parent=1 // pred_check
      _
    $region3: #{bilstm_1_forward.1} parent=1 // pred_check_branch
      %13 = sbr.rel (0) target = $region5
    $region4: #{bilstm_1_forward.1} parent=1 // pred_region
      _
    $region5: #{bilstm_1_forward.1} parent=1 // pred_fallthru
      _
    // Predicated region
    $region6: #{bilstm_1_forward.1} parent=1 // pred_check
      _
    $region7: #{bilstm_1_forward.1} parent=1 // pred_check_branch
      %15 = sbr.rel (0) target = $region9
    $region8: #{bilstm_1_forward.1} parent=1 // pred_region
      _
    $region9: #{bilstm_1_forward.1} parent=1 // pred_fallthru
      _
    // Predicated region
    $region10: #{bilstm_1_forward.1} parent=1 // pred_check
      _
    $region11: #{bilstm_1_forward.1} parent=1 // pred_check_branch
      %17 = sbr.rel (0) target = $region13
    $region12: #{bilstm_1_forward.1} parent=1 // pred_region
      _
    $region13: #{bilstm_1_forward.1} parent=1 // pred_fallthru
      _
    // Predicated region
    $region14: #{bilstm_1_forward.1} parent=1 // pred_check
      _
    $region15: #{bilstm_1_forward.1} parent=1 // pred_check_branch
      %19 = sbr.rel (0) target = $region17
    $region16: #{bilstm_1_forward.1} parent=1 // pred_region
      _
    $region17: #{bilstm_1_forward.1} parent=1 // pred_fallthru
      _
    // Predicated region
    $region18: #{bilstm_1_forward.1} parent=1 // pred_check
      _
    $region19: #{bilstm_1_forward.1} parent=1 // pred_check_branch
      %21 = sbr.rel (0) target = $region21
    $region20: #{bilstm_1_forward.1} parent=1 // pred_region
      _
    $region21: #{bilstm_1_forward.1} parent=1 // pred_fallthru
      _
    // Predicated region
    $region22: #{bilstm_1_forward.1} parent=1 // pred_check
      _
    $region23: #{bilstm_1_forward.1} parent=1 // pred_check_branch
      %23 = sbr.rel (0) target = $region25
    $region24: #{bilstm_1_forward.1} parent=1 // pred_region
      _
    $region25: #{bilstm_1_forward.1} parent=1 // pred_fallthru
      _
    %v25 = vld [vmem:[%s1] sm:$0xff]
    %v26 = vld [vmem:[%s1 + $0x8] sm:$0xff]
    %v27 = vld [vmem:[%s1 + $0x10] sm:$0xff]
    %v28 = vld [vmem:[%s1 + $0x18] sm:$0xff]
    %v29 = vld [vmem:[%s1 + $0x20] sm:$0xff]
    %v30 = vld [vmem:[%s1 + $0x28] sm:$0xff]
    %v31 = vld [vmem:[%s1 + $0x30] sm:$0xff]
    %v32 = vld [vmem:[%s1 + $0x38] sm:$0xff]
    %v33 = vld [vmem:[%s2] sm:$0x3]
    %v34 = vld [vmem:[%s3] sm:$0x3]
    %v35 = vld [vmem:[%s0] sm:$0xf]
    %v36 = vpack.c.bf16 %v33, %v33
    %v45 = vunpack.c.l.b16 %v25
    %v46 = vunpack.c.h.b16 %v25
    %v47 = vunpack.c.l.b16 %v26
    %v48 = vunpack.c.h.b16 %v26
    %v49 = vunpack.c.l.b16 %v27
    %v50 = vunpack.c.h.b16 %v27
    %v51 = vunpack.c.l.b16 %v28
    %v52 = vunpack.c.h.b16 %v28
    %v53 = vunpack.c.l.b16 %v29
    %v54 = vunpack.c.h.b16 %v29
    %v55 = vunpack.c.l.b16 %v30
    %v56 = vunpack.c.h.b16 %v30
    %v57 = vunpack.c.l.b16 %v31
    %v58 = vunpack.c.h.b16 %v31
    %v59 = vunpack.c.l.b16 %v32
    %v60 = vunpack.c.h.b16 %v32
    %v61 = vpack.c.b16 %v47, %v45
    %v62 = vpack.c.b16 %v48, %v46
    %v63 = vpack.c.b16 %v51, %v49
    %v64 = vpack.c.b16 %v52, %v50
    %v65 = vpack.c.b16 %v55, %v53
    %v66 = vpack.c.b16 %v56, %v54
    %v67 = vpack.c.b16 %v59, %v57
    %v68 = vpack.c.b16 %v60, %v58
    %v79 = vunpack.c.l.s4 1983009808
    %v80 = vunpack.c.0.s8 %v79
    %v81 = vlaneseq
    %v82 = vshrl.u32 %v81, 7
    %v83 = vsub.s32 %v80, %v82
    %v84 = vrot.slane %v35, %v83
    %v85 = vcombine.high %v84, %v84
    %vm88 = vcmask 523264
    %v90 = vsel %vm88, %v36, 0
    %92 = vmatprep.subr.bf16.mxu0 %v62
    %93 = vmatpush1.bf16.msra.mxu0 %v61
    %94 = vmatprep.subr.bf16.mxu0 %v64
    %95 = vmatpush1.bf16.msra.mxu0 %v63
    %96 = vmatprep.subr.bf16.mxu0 %v66
    %97 = vmatpush1.bf16.msra.mxu0 %v65
    %98 = vmatprep.subr.bf16.mxu0 %v68
    %99 = vmatpush1.bf16.msra.mxu0 %v67
    %100 = vmatprep.subr.bf16.mxu0 0
    %101 = vmatpush1.bf16.msra.mxu0 0
    %102 = vmatprep.subr.bf16.mxu0 0
    %103 = vmatpush1.bf16.msra.mxu0 0
    %104 = vmatprep.subr.bf16.mxu0 0
    %105 = vmatpush1.bf16.msra.mxu0 0
    %106 = vmatprep.subr.bf16.mxu0 0
    %107 = vmatpush1.bf16.msra.mxu0 0
    %108 = vmatprep.subr.bf16.mxu0 0
    %109 = vmatpush1.bf16.msra.mxu0 0
    %110 = vmatprep.subr.bf16.mxu0 0
    %111 = vmatpush1.bf16.msra.mxu0 0
    %112 = vmatprep.subr.bf16.mxu0 0
    %113 = vmatpush1.bf16.msra.mxu0 0
    %114 = vmatprep.subr.bf16.mxu0 0
    %115 = vmatpush1.bf16.msra.mxu0 0
    %116 = vmatprep.subr.bf16.mxu0 0
    %117 = vmatpush1.bf16.msra.mxu0 0
    %118 = vmatprep.subr.bf16.mxu0 0
    %119 = vmatpush1.bf16.msra.mxu0 0
    %120 = vmatprep.subr.bf16.mxu0 0
    %121 = vmatpush1.bf16.msra.mxu0 0
    %122 = vmatprep.subr.bf16.mxu0 0
    %123 = vmatpush1.bf16.msra.mxu0 0
    %124 = vmatprep.mubr.bf16.mxu0 0
    %125 = vmatmul.mubr.bf16.gmra.mrb[0].mxu0 %v90
    %v126 = vpop.f32.mrb[0].mxu0
    %v127 = vadd.f32 %v84, %v126
    %v128 = vpop.f32.mrb[0].mxu0
    %v129 = vadd.f32 %v85, %v128
    %v130 = vpop.f32.mrb[0].mxu0
    %v131 = vpop.f32.mrb[0].mxu0
    %132 = vdwg.mxu0
    %v133 = vxor.u32 %v127, 2147483648
    %v134 = vxor.u32 %v129, 2147483648
    %v135 = vmul.f32 %v133, 1.442695
    %v136 = vpow.pop %v135
    %v137 = vmul.f32 %v134, 1.442695
    %v138 = vpow.pop %v137
    %v139 = vadd.f32 %v136, 1.0
    %v140 = vadd.f32 %v138, 1.0
    %v141 = vrcp.pop %v139
    %v142 = vmul.f32 1.0, %v141
    %v143 = vrcp.pop %v140
    %v144 = vmul.f32 1.0, %v143
    %v145 = vtanh.pop %v129
    %147 = vrot.lane.b32.xlu0 %v34, 64
    %v148 = vpop.permute.xlu0 %147
    %v150 = vmul.f32 %v142, %v148
    %152 = vrot.lane.b32.xlu0 %v145, 64
    %v153 = vpop.permute.xlu0 %152
    %v155 = vmul.f32 %v142, %v153
    %157 = vrot.lane.b32.xlu0 %v155, 64
    %v158 = vpop.permute.xlu0 %157
    %v160 = vadd.f32 %v150, %v158
    %v161 = vtanh.pop %v160
    %163 = vrot.lane.b32.xlu0 %v161, 64
    %v164 = vpop.permute.xlu0 %163
    %v166 = vmul.f32 %v144, %v164
    %s167 = scalar_lea.vmem %s0, 4
    %v168 = vld [vmem:[%s167] sm:$0xf]
    %v169 = vpack.c.bf16 %v166, %v166
    %v172 = vunpack.c.l.s4 1983009808
    %v173 = vunpack.c.0.s8 %v172
    %v174 = vlaneseq
    %v175 = vshrl.u32 %v174, 7
    %v176 = vsub.s32 %v173, %v175
    %v177 = vrot.slane %v168, %v176
    %v178 = vcombine.high %v177, %v177
    %v182 = vsel %vm88, %v169, 0
    %184 = vmatprep.subr.bf16.mxu0 %v62
    %185 = vmatpush1.bf16.msra.mxu0 %v61
    %186 = vmatprep.subr.bf16.mxu0 %v64
    %187 = vmatpush1.bf16.msra.mxu0 %v63
    %188 = vmatprep.subr.bf16.mxu0 %v66
    %189 = vmatpush1.bf16.msra.mxu0 %v65
    %190 = vmatprep.subr.bf16.mxu0 %v68
    %191 = vmatpush1.bf16.msra.mxu0 %v67
    %192 = vmatprep.subr.bf16.mxu0 0
    %193 = vmatpush1.bf16.msra.mxu0 0
    %194 = vmatprep.subr.bf16.mxu0 0
    %195 = vmatpush1.bf16.msra.mxu0 0
    %196 = vmatprep.subr.bf16.mxu0 0
    %197 = vmatpush1.bf16.msra.mxu0 0
    %198 = vmatprep.subr.bf16.mxu0 0
    %199 = vmatpush1.bf16.msra.mxu0 0
    %200 = vmatprep.subr.bf16.mxu0 0
    %201 = vmatpush1.bf16.msra.mxu0 0
    %202 = vmatprep.subr.bf16.mxu0 0
    %203 = vmatpush1.bf16.msra.mxu0 0
    %204 = vmatprep.subr.bf16.mxu0 0
    %205 = vmatpush1.bf16.msra.mxu0 0
    %206 = vmatprep.subr.bf16.mxu0 0
    %207 = vmatpush1.bf16.msra.mxu0 0
    %208 = vmatprep.subr.bf16.mxu0 0
    %209 = vmatpush1.bf16.msra.mxu0 0
    %210 = vmatprep.subr.bf16.mxu0 0
    %211 = vmatpush1.bf16.msra.mxu0 0
    %212 = vmatprep.subr.bf16.mxu0 0
    %213 = vmatpush1.bf16.msra.mxu0 0
    %214 = vmatprep.subr.bf16.mxu0 0
    %215 = vmatpush1.bf16.msra.mxu0 0
    %216 = vmatprep.mubr.bf16.mxu0 0
    %217 = vmatmul.mubr.bf16.gmra.mrb[0].mxu0 %v182
    %v218 = vpop.f32.mrb[0].mxu0
    %v219 = vadd.f32 %v177, %v218
    %v220 = vpop.f32.mrb[0].mxu0
    %v221 = vadd.f32 %v178, %v220
    %v222 = vpop.f32.mrb[0].mxu0
    %v223 = vpop.f32.mrb[0].mxu0
    %224 = vdwg.mxu0
    %v225 = vxor.u32 %v219, 2147483648
    %v226 = vxor.u32 %v221, 2147483648
    %v227 = vmul.f32 %v225, 1.442695
    %v228 = vpow.pop %v227
    %v229 = vmul.f32 %v226, 1.442695
    %v230 = vpow.pop %v229
    %v231 = vadd.f32 %v228, 1.0
    %v232 = vadd.f32 %v230, 1.0
    %v233 = vrcp.pop %v231
    %v234 = vmul.f32 1.0, %v233
    %v235 = vrcp.pop %v232
    %v236 = vmul.f32 1.0, %v235
    %v237 = vtanh.pop %v221
    %v238 = vmul.f32 %v234, %v160
    %240 = vrot.lane.b32.xlu0 %v237, 64
    %v241 = vpop.permute.xlu0 %240
    %v243 = vmul.f32 %v234, %v241
    %245 = vrot.lane.b32.xlu0 %v243, 64
    %v246 = vpop.permute.xlu0 %245
    %v248 = vadd.f32 %v238, %v246
    %v249 = vtanh.pop %v248
    %251 = vrot.lane.b32.xlu0 %v249, 64
    %v252 = vpop.permute.xlu0 %251
    %v254 = vmul.f32 %v236, %v252
    %v255 = vmax.f32 %v166, %v254
    %s256 = scalar_lea.vmem %s0, 8
    %v257 = vld [vmem:[%s256] sm:$0xf]
    %v258 = vpack.c.bf16 %v254, %v254
    %v261 = vunpack.c.l.s4 1983009808
    %v262 = vunpack.c.0.s8 %v261
    %v263 = vlaneseq
    %v264 = vshrl.u32 %v263, 7
    %v265 = vsub.s32 %v262, %v264
    %v266 = vrot.slane %v257, %v265
    %v267 = vcombine.high %v266, %v266
    %v271 = vsel %vm88, %v258, 0
    %273 = vmatprep.subr.bf16.mxu0 %v62
    %274 = vmatpush1.bf16.msra.mxu0 %v61
    %275 = vmatprep.subr.bf16.mxu0 %v64
    %276 = vmatpush1.bf16.msra.mxu0 %v63
    %277 = vmatprep.subr.bf16.mxu0 %v66
    %278 = vmatpush1.bf16.msra.mxu0 %v65
    %279 = vmatprep.subr.bf16.mxu0 %v68
    %280 = vmatpush1.bf16.msra.mxu0 %v67
    %281 = vmatprep.subr.bf16.mxu0 0
    %282 = vmatpush1.bf16.msra.mxu0 0
    %283 = vmatprep.subr.bf16.mxu0 0
    %284 = vmatpush1.bf16.msra.mxu0 0
    %285 = vmatprep.subr.bf16.mxu0 0
    %286 = vmatpush1.bf16.msra.mxu0 0
    %287 = vmatprep.subr.bf16.mxu0 0
    %288 = vmatpush1.bf16.msra.mxu0 0
    %289 = vmatprep.subr.bf16.mxu0 0
    %290 = vmatpush1.bf16.msra.mxu0 0
    %291 = vmatprep.subr.bf16.mxu0 0
    %292 = vmatpush1.bf16.msra.mxu0 0
    %293 = vmatprep.subr.bf16.mxu0 0
    %294 = vmatpush1.bf16.msra.mxu0 0
    %295 = vmatprep.subr.bf16.mxu0 0
    %296 = vmatpush1.bf16.msra.mxu0 0
    %297 = vmatprep.subr.bf16.mxu0 0
    %298 = vmatpush1.bf16.msra.mxu0 0
    %299 = vmatprep.subr.bf16.mxu0 0
    %300 = vmatpush1.bf16.msra.mxu0 0
    %301 = vmatprep.subr.bf16.mxu0 0
    %302 = vmatpush1.bf16.msra.mxu0 0
    %303 = vmatprep.subr.bf16.mxu0 0
    %304 = vmatpush1.bf16.msra.mxu0 0
    %305 = vmatprep.mubr.bf16.mxu0 0
    %306 = vmatmul.mubr.bf16.gmra.mrb[0].mxu0 %v271
    %v307 = vpop.f32.mrb[0].mxu0
    %v308 = vadd.f32 %v266, %v307
    %v309 = vpop.f32.mrb[0].mxu0
    %v310 = vadd.f32 %v267, %v309
    %v311 = vpop.f32.mrb[0].mxu0
    %v312 = vpop.f32.mrb[0].mxu0
    %313 = vdwg.mxu0
    %v314 = vxor.u32 %v308, 2147483648
    %v315 = vxor.u32 %v310, 2147483648
    %v316 = vmul.f32 %v314, 1.442695
    %v317 = vpow.pop %v316
    %v318 = vmul.f32 %v315, 1.442695
    %v319 = vpow.pop %v318
    %v320 = vadd.f32 %v317, 1.0
    %v321 = vadd.f32 %v319, 1.0
    %v322 = vrcp.pop %v320
    %v323 = vmul.f32 1.0, %v322
    %v324 = vrcp.pop %v321
    %v325 = vmul.f32 1.0, %v324
    %v326 = vtanh.pop %v310
    %v327 = vmul.f32 %v323, %v248
    %329 = vrot.lane.b32.xlu0 %v326, 64
    %v330 = vpop.permute.xlu0 %329
    %v332 = vmul.f32 %v323, %v330
    %334 = vrot.lane.b32.xlu0 %v332, 64
    %v335 = vpop.permute.xlu0 %334
    %v337 = vadd.f32 %v327, %v335
    %v338 = vtanh.pop %v337
    %340 = vrot.lane.b32.xlu0 %v338, 64
    %v341 = vpop.permute.xlu0 %340
    %v343 = vmul.f32 %v325, %v341
    %v344 = vmax.f32 %v255, %v343
    %s345 = scalar_lea.vmem %s0, 12
    %v346 = vld [vmem:[%s345] sm:$0xf]
    %v347 = vpack.c.bf16 %v343, %v343
    %v350 = vunpack.c.l.s4 1983009808
    %v351 = vunpack.c.0.s8 %v350
    %v352 = vlaneseq
    %v353 = vshrl.u32 %v352, 7
    %v354 = vsub.s32 %v351, %v353
    %v355 = vrot.slane %v346, %v354
    %v356 = vcombine.high %v355, %v355
    %v360 = vsel %vm88, %v347, 0
    %362 = vmatprep.subr.bf16.mxu0 %v62
    %363 = vmatpush1.bf16.msra.mxu0 %v61
    %364 = vmatprep.subr.bf16.mxu0 %v64
    %365 = vmatpush1.bf16.msra.mxu0 %v63
    %366 = vmatprep.subr.bf16.mxu0 %v66
    %367 = vmatpush1.bf16.msra.mxu0 %v65
    %368 = vmatprep.subr.bf16.mxu0 %v68
    %369 = vmatpush1.bf16.msra.mxu0 %v67
    %370 = vmatprep.subr.bf16.mxu0 0
    %371 = vmatpush1.bf16.msra.mxu0 0
    %372 = vmatprep.subr.bf16.mxu0 0
    %373 = vmatpush1.bf16.msra.mxu0 0
    %374 = vmatprep.subr.bf16.mxu0 0
    %375 = vmatpush1.bf16.msra.mxu0 0
    %376 = vmatprep.subr.bf16.mxu0 0
    %377 = vmatpush1.bf16.msra.mxu0 0
    %378 = vmatprep.subr.bf16.mxu0 0
    %379 = vmatpush1.bf16.msra.mxu0 0
    %380 = vmatprep.subr.bf16.mxu0 0
    %381 = vmatpush1.bf16.msra.mxu0 0
    %382 = vmatprep.subr.bf16.mxu0 0
    %383 = vmatpush1.bf16.msra.mxu0 0
    %384 = vmatprep.subr.bf16.mxu0 0
    %385 = vmatpush1.bf16.msra.mxu0 0
    %386 = vmatprep.subr.bf16.mxu0 0
    %387 = vmatpush1.bf16.msra.mxu0 0
    %388 = vmatprep.subr.bf16.mxu0 0
    %389 = vmatpush1.bf16.msra.mxu0 0
    %390 = vmatprep.subr.bf16.mxu0 0
    %391 = vmatpush1.bf16.msra.mxu0 0
    %392 = vmatprep.subr.bf16.mxu0 0
    %393 = vmatpush1.bf16.msra.mxu0 0
    %394 = vmatprep.mubr.bf16.mxu0 0
    %395 = vmatmul.mubr.bf16.gmra.mrb[0].mxu0 %v360
    %v396 = vpop.f32.mrb[0].mxu0
    %v397 = vadd.f32 %v355, %v396
    %v398 = vpop.f32.mrb[0].mxu0
    %v399 = vadd.f32 %v356, %v398
    %v400 = vpop.f32.mrb[0].mxu0
    %v401 = vpop.f32.mrb[0].mxu0
    %402 = vdwg.mxu0
    %v403 = vxor.u32 %v397, 2147483648
    %v404 = vxor.u32 %v399, 2147483648
    %v405 = vmul.f32 %v403, 1.442695
    %v406 = vpow.pop %v405
    %v407 = vmul.f32 %v404, 1.442695
    %v408 = vpow.pop %v407
    %v409 = vadd.f32 %v406, 1.0
    %v410 = vadd.f32 %v408, 1.0
    %v411 = vrcp.pop %v409
    %v412 = vmul.f32 1.0, %v411
    %v413 = vrcp.pop %v410
    %v414 = vmul.f32 1.0, %v413
    %v415 = vtanh.pop %v399
    %v416 = vmul.f32 %v412, %v337
    %418 = vrot.lane.b32.xlu0 %v415, 64
    %v419 = vpop.permute.xlu0 %418
    %v421 = vmul.f32 %v412, %v419
    %423 = vrot.lane.b32.xlu0 %v421, 64
    %v424 = vpop.permute.xlu0 %423
    %v426 = vadd.f32 %v416, %v424
    %v427 = vtanh.pop %v426
    %429 = vrot.lane.b32.xlu0 %v427, 64
    %v430 = vpop.permute.xlu0 %429
    %v432 = vmul.f32 %v414, %v430
    %v433 = vmax.f32 %v344, %v432
    %s434 = scalar_lea.vmem %s0, 16
    %v435 = vld [vmem:[%s434] sm:$0xf]
    %v436 = vpack.c.bf16 %v432, %v432
    %v439 = vunpack.c.l.s4 1983009808
    %v440 = vunpack.c.0.s8 %v439
    %v441 = vlaneseq
    %v442 = vshrl.u32 %v441, 7
    %v443 = vsub.s32 %v440, %v442
    %v444 = vrot.slane %v435, %v443
    %v445 = vcombine.high %v444, %v444
    %v449 = vsel %vm88, %v436, 0
    %451 = vmatprep.subr.bf16.mxu0 %v62
    %452 = vmatpush1.bf16.msra.mxu0 %v61
    %453 = vmatprep.subr.bf16.mxu0 %v64
    %454 = vmatpush1.bf16.msra.mxu0 %v63
    %455 = vmatprep.subr.bf16.mxu0 %v66
    %456 = vmatpush1.bf16.msra.mxu0 %v65
    %457 = vmatprep.subr.bf16.mxu0 %v68
    %458 = vmatpush1.bf16.msra.mxu0 %v67
    %459 = vmatprep.subr.bf16.mxu0 0
    %460 = vmatpush1.bf16.msra.mxu0 0
    %461 = vmatprep.subr.bf16.mxu0 0
    %462 = vmatpush1.bf16.msra.mxu0 0
    %463 = vmatprep.subr.bf16.mxu0 0
    %464 = vmatpush1.bf16.msra.mxu0 0
    %465 = vmatprep.subr.bf16.mxu0 0
    %466 = vmatpush1.bf16.msra.mxu0 0
    %467 = vmatprep.subr.bf16.mxu0 0
    %468 = vmatpush1.bf16.msra.mxu0 0
    %469 = vmatprep.subr.bf16.mxu0 0
    %470 = vmatpush1.bf16.msra.mxu0 0
    %471 = vmatprep.subr.bf16.mxu0 0
    %472 = vmatpush1.bf16.msra.mxu0 0
    %473 = vmatprep.subr.bf16.mxu0 0
    %474 = vmatpush1.bf16.msra.mxu0 0
    %475 = vmatprep.subr.bf16.mxu0 0
    %476 = vmatpush1.bf16.msra.mxu0 0
    %477 = vmatprep.subr.bf16.mxu0 0
    %478 = vmatpush1.bf16.msra.mxu0 0
    %479 = vmatprep.subr.bf16.mxu0 0
    %480 = vmatpush1.bf16.msra.mxu0 0
    %481 = vmatprep.subr.bf16.mxu0 0
    %482 = vmatpush1.bf16.msra.mxu0 0
    %483 = vmatprep.mubr.bf16.mxu0 0
    %484 = vmatmul.mubr.bf16.gmra.mrb[0].mxu0 %v449
    %v485 = vpop.f32.mrb[0].mxu0
    %v486 = vadd.f32 %v444, %v485
    %v487 = vpop.f32.mrb[0].mxu0
    %v488 = vadd.f32 %v445, %v487
    %v489 = vpop.f32.mrb[0].mxu0
    %v490 = vpop.f32.mrb[0].mxu0
    %491 = vdwg.mxu0
    %v492 = vxor.u32 %v486, 2147483648
    %v493 = vxor.u32 %v488, 2147483648
    %v494 = vmul.f32 %v492, 1.442695
    %v495 = vpow.pop %v494
    %v496 = vmul.f32 %v493, 1.442695
    %v497 = vpow.pop %v496
    %v498 = vadd.f32 %v495, 1.0
    %v499 = vadd.f32 %v497, 1.0
    %v500 = vrcp.pop %v498
    %v501 = vmul.f32 1.0, %v500
    %v502 = vrcp.pop %v499
    %v503 = vmul.f32 1.0, %v502
    %v504 = vtanh.pop %v488
    %v505 = vmul.f32 %v501, %v426
    %507 = vrot.lane.b32.xlu0 %v504, 64
    %v508 = vpop.permute.xlu0 %507
    %v510 = vmul.f32 %v501, %v508
    %512 = vrot.lane.b32.xlu0 %v510, 64
    %v513 = vpop.permute.xlu0 %512
    %v515 = vadd.f32 %v505, %v513
    %v516 = vtanh.pop %v515
    %518 = vrot.lane.b32.xlu0 %v516, 64
    %v519 = vpop.permute.xlu0 %518
    %v521 = vmul.f32 %v503, %v519
    %v522 = vmax.f32 %v433, %v521
    %s523 = scalar_lea.vmem %s0, 20
    %v524 = vld [vmem:[%s523] sm:$0xf]
    %v525 = vpack.c.bf16 %v521, %v521
    %v528 = vunpack.c.l.s4 1983009808
    %v529 = vunpack.c.0.s8 %v528
    %v530 = vlaneseq
    %v531 = vshrl.u32 %v530, 7
    %v532 = vsub.s32 %v529, %v531
    %v533 = vrot.slane %v524, %v532
    %v534 = vcombine.high %v533, %v533
    %v538 = vsel %vm88, %v525, 0
    %540 = vmatprep.subr.bf16.mxu0 %v62
    %541 = vmatpush1.bf16.msra.mxu0 %v61
    %542 = vmatprep.subr.bf16.mxu0 %v64
    %543 = vmatpush1.bf16.msra.mxu0 %v63
    %544 = vmatprep.subr.bf16.mxu0 %v66
    %545 = vmatpush1.bf16.msra.mxu0 %v65
    %546 = vmatprep.subr.bf16.mxu0 %v68
    %547 = vmatpush1.bf16.msra.mxu0 %v67
    %548 = vmatprep.subr.bf16.mxu0 0
    %549 = vmatpush1.bf16.msra.mxu0 0
    %550 = vmatprep.subr.bf16.mxu0 0
    %551 = vmatpush1.bf16.msra.mxu0 0
    %552 = vmatprep.subr.bf16.mxu0 0
    %553 = vmatpush1.bf16.msra.mxu0 0
    %554 = vmatprep.subr.bf16.mxu0 0
    %555 = vmatpush1.bf16.msra.mxu0 0
    %556 = vmatprep.subr.bf16.mxu0 0
    %557 = vmatpush1.bf16.msra.mxu0 0
    %558 = vmatprep.subr.bf16.mxu0 0
    %559 = vmatpush1.bf16.msra.mxu0 0
    %560 = vmatprep.subr.bf16.mxu0 0
    %561 = vmatpush1.bf16.msra.mxu0 0
    %562 = vmatprep.subr.bf16.mxu0 0
    %563 = vmatpush1.bf16.msra.mxu0 0
    %564 = vmatprep.subr.bf16.mxu0 0
    %565 = vmatpush1.bf16.msra.mxu0 0
    %566 = vmatprep.subr.bf16.mxu0 0
    %567 = vmatpush1.bf16.msra.mxu0 0
    %568 = vmatprep.subr.bf16.mxu0 0
    %569 = vmatpush1.bf16.msra.mxu0 0
    %570 = vmatprep.subr.bf16.mxu0 0
    %571 = vmatpush1.bf16.msra.mxu0 0
    %572 = vmatprep.mubr.bf16.mxu0 0
    %573 = vmatmul.mubr.bf16.gmra.mrb[0].mxu0 %v538
    %v574 = vpop.f32.mrb[0].mxu0
    %v575 = vadd.f32 %v533, %v574
    %v576 = vpop.f32.mrb[0].mxu0
    %v577 = vadd.f32 %v534, %v576
    %v578 = vpop.f32.mrb[0].mxu0
    %v579 = vpop.f32.mrb[0].mxu0
    %580 = vdwg.mxu0
    %v581 = vxor.u32 %v575, 2147483648
    %v582 = vxor.u32 %v577, 2147483648
    %v583 = vmul.f32 %v581, 1.442695
    %v584 = vpow.pop %v583
    %v585 = vmul.f32 %v582, 1.442695
    %v586 = vpow.pop %v585
    %v587 = vadd.f32 %v584, 1.0
    %v588 = vadd.f32 %v586, 1.0
    %v589 = vrcp.pop %v587
    %v590 = vmul.f32 1.0, %v589
    %v591 = vrcp.pop %v588
    %v592 = vmul.f32 1.0, %v591
    %v593 = vtanh.pop %v577
    %v594 = vmul.f32 %v590, %v515
    %596 = vrot.lane.b32.xlu0 %v593, 64
    %v597 = vpop.permute.xlu0 %596
    %v599 = vmul.f32 %v590, %v597
    %601 = vrot.lane.b32.xlu0 %v599, 64
    %v602 = vpop.permute.xlu0 %601
    %v604 = vadd.f32 %v594, %v602
    %v605 = vtanh.pop %v604
    %607 = vrot.lane.b32.xlu0 %v605, 64
    %v608 = vpop.permute.xlu0 %607
    %v610 = vmul.f32 %v592, %v608
    %v611 = vmax.f32 %v522, %v610
    %s612 = scalar_lea.vmem %s0, 24
    %v613 = vld [vmem:[%s612] sm:$0xf]
    %v614 = vpack.c.bf16 %v610, %v610
    %v617 = vunpack.c.l.s4 1983009808
    %v618 = vunpack.c.0.s8 %v617
    %v619 = vlaneseq
    %v620 = vshrl.u32 %v619, 7
    %v621 = vsub.s32 %v618, %v620
    %v622 = vrot.slane %v613, %v621
    %v623 = vcombine.high %v622, %v622
    %v627 = vsel %vm88, %v614, 0
    %629 = vmatprep.subr.bf16.mxu0 %v62
    %630 = vmatpush1.bf16.msra.mxu0 %v61
    %631 = vmatprep.subr.bf16.mxu0 %v64
    %632 = vmatpush1.bf16.msra.mxu0 %v63
    %633 = vmatprep.subr.bf16.mxu0 %v66
    %634 = vmatpush1.bf16.msra.mxu0 %v65
    %635 = vmatprep.subr.bf16.mxu0 %v68
    %636 = vmatpush1.bf16.msra.mxu0 %v67
    %637 = vmatprep.subr.bf16.mxu0 0
    %638 = vmatpush1.bf16.msra.mxu0 0
    %639 = vmatprep.subr.bf16.mxu0 0
    %640 = vmatpush1.bf16.msra.mxu0 0
    %641 = vmatprep.subr.bf16.mxu0 0
    %642 = vmatpush1.bf16.msra.mxu0 0
    %643 = vmatprep.subr.bf16.mxu0 0
    %644 = vmatpush1.bf16.msra.mxu0 0
    %645 = vmatprep.subr.bf16.mxu0 0
    %646 = vmatpush1.bf16.msra.mxu0 0
    %647 = vmatprep.subr.bf16.mxu0 0
    %648 = vmatpush1.bf16.msra.mxu0 0
    %649 = vmatprep.subr.bf16.mxu0 0
    %650 = vmatpush1.bf16.msra.mxu0 0
    %651 = vmatprep.subr.bf16.mxu0 0
    %652 = vmatpush1.bf16.msra.mxu0 0
    %653 = vmatprep.subr.bf16.mxu0 0
    %654 = vmatpush1.bf16.msra.mxu0 0
    %655 = vmatprep.subr.bf16.mxu0 0
    %656 = vmatpush1.bf16.msra.mxu0 0
    %657 = vmatprep.subr.bf16.mxu0 0
    %658 = vmatpush1.bf16.msra.mxu0 0
    %659 = vmatprep.subr.bf16.mxu0 0
    %660 = vmatpush1.bf16.msra.mxu0 0
    %661 = vmatprep.mubr.bf16.mxu0 0
    %662 = vmatmul.mubr.bf16.gmra.mrb[0].mxu0 %v627
    %v663 = vpop.f32.mrb[0].mxu0
    %v664 = vadd.f32 %v622, %v663
    %v665 = vpop.f32.mrb[0].mxu0
    %v666 = vadd.f32 %v623, %v665
    %v667 = vpop.f32.mrb[0].mxu0
    %v668 = vpop.f32.mrb[0].mxu0
    %669 = vdwg.mxu0
    %v670 = vxor.u32 %v664, 2147483648
    %v671 = vxor.u32 %v666, 2147483648
    %v672 = vmul.f32 %v670, 1.442695
    %v673 = vpow.pop %v672
    %v674 = vmul.f32 %v671, 1.442695
    %v675 = vpow.pop %v674
    %v676 = vadd.f32 %v673, 1.0
    %v677 = vadd.f32 %v675, 1.0
    %v678 = vrcp.pop %v676
    %v679 = vmul.f32 1.0, %v678
    %v680 = vrcp.pop %v677
    %v681 = vmul.f32 1.0, %v680
    %v682 = vtanh.pop %v666
    %v683 = vmul.f32 %v679, %v604
    %685 = vrot.lane.b32.xlu0 %v682, 64
    %v686 = vpop.permute.xlu0 %685
    %v688 = vmul.f32 %v679, %v686
    %690 = vrot.lane.b32.xlu0 %v688, 64
    %v691 = vpop.permute.xlu0 %690
    %v693 = vadd.f32 %v683, %v691
    %v694 = vtanh.pop %v693
    %696 = vrot.lane.b32.xlu0 %v694, 64
    %v697 = vpop.permute.xlu0 %696
    %v699 = vmul.f32 %v681, %v697
    %v700 = vmax.f32 %v611, %v699
    %s701 = scalar_lea.vmem %s0, 28
    %v702 = vld [vmem:[%s701] sm:$0xf]
    %v703 = vpack.c.bf16 %v699, %v699
    %v706 = vunpack.c.l.s4 1983009808
    %v707 = vunpack.c.0.s8 %v706
    %v708 = vlaneseq
    %v709 = vshrl.u32 %v708, 7
    %v710 = vsub.s32 %v707, %v709
    %v711 = vrot.slane %v702, %v710
    %v712 = vcombine.high %v711, %v711
    %v716 = vsel %vm88, %v703, 0
    %718 = vmatprep.subr.bf16.mxu0 %v62
    %719 = vmatpush1.bf16.msra.mxu0 %v61
    %720 = vmatprep.subr.bf16.mxu0 %v64
    %721 = vmatpush1.bf16.msra.mxu0 %v63
    %722 = vmatprep.subr.bf16.mxu0 %v66
    %723 = vmatpush1.bf16.msra.mxu0 %v65
    %724 = vmatprep.subr.bf16.mxu0 %v68
    %725 = vmatpush1.bf16.msra.mxu0 %v67
    %726 = vmatprep.subr.bf16.mxu0 0
    %727 = vmatpush1.bf16.msra.mxu0 0
    %728 = vmatprep.subr.bf16.mxu0 0
    %729 = vmatpush1.bf16.msra.mxu0 0
    %730 = vmatprep.subr.bf16.mxu0 0
    %731 = vmatpush1.bf16.msra.mxu0 0
    %732 = vmatprep.subr.bf16.mxu0 0
    %733 = vmatpush1.bf16.msra.mxu0 0
    %734 = vmatprep.subr.bf16.mxu0 0
    %735 = vmatpush1.bf16.msra.mxu0 0
    %736 = vmatprep.subr.bf16.mxu0 0
    %737 = vmatpush1.bf16.msra.mxu0 0
    %738 = vmatprep.subr.bf16.mxu0 0
    %739 = vmatpush1.bf16.msra.mxu0 0
    %740 = vmatprep.subr.bf16.mxu0 0
    %741 = vmatpush1.bf16.msra.mxu0 0
    %742 = vmatprep.subr.bf16.mxu0 0
    %743 = vmatpush1.bf16.msra.mxu0 0
    %744 = vmatprep.subr.bf16.mxu0 0
    %745 = vmatpush1.bf16.msra.mxu0 0
    %746 = vmatprep.subr.bf16.mxu0 0
    %747 = vmatpush1.bf16.msra.mxu0 0
    %748 = vmatprep.subr.bf16.mxu0 0
    %749 = vmatpush1.bf16.msra.mxu0 0
    %750 = vmatprep.mubr.bf16.mxu0 0
    %751 = vmatmul.mubr.bf16.gmra.mrb[0].mxu0 %v716
    %v752 = vpop.f32.mrb[0].mxu0
    %v753 = vadd.f32 %v711, %v752
    %v754 = vpop.f32.mrb[0].mxu0
    %v755 = vadd.f32 %v712, %v754
    %v756 = vpop.f32.mrb[0].mxu0
    %v757 = vpop.f32.mrb[0].mxu0
    %758 = vdwg.mxu0
    %v759 = vxor.u32 %v753, 2147483648
    %v760 = vxor.u32 %v755, 2147483648
    %v761 = vmul.f32 %v759, 1.442695
    %v762 = vpow.pop %v761
    %v763 = vmul.f32 %v760, 1.442695
    %v764 = vpow.pop %v763
    %v765 = vadd.f32 %v762, 1.0
    %v766 = vadd.f32 %v764, 1.0
    %v767 = vrcp.pop %v765
    %v768 = vmul.f32 1.0, %v767
    %v769 = vrcp.pop %v766
    %v770 = vmul.f32 1.0, %v769
    %v771 = vtanh.pop %v755
    %v772 = vmul.f32 %v768, %v693
    %774 = vrot.lane.b32.xlu0 %v771, 64
    %v775 = vpop.permute.xlu0 %774
    %v777 = vmul.f32 %v768, %v775
    %779 = vrot.lane.b32.xlu0 %v777, 64
    %v780 = vpop.permute.xlu0 %779
    %v782 = vadd.f32 %v772, %v780
    %v783 = vtanh.pop %v782
    %785 = vrot.lane.b32.xlu0 %v783, 64
    %v786 = vpop.permute.xlu0 %785
    %v788 = vmul.f32 %v770, %v786
    %v789 = vmax.f32 %v700, %v788
    %v790 = vtanh.pop %v789
    %v791 = vld [vmem:[%s4] sm:$0xff]
    %v792 = vld [vmem:[%s4 + $0x8] sm:$0xff]
    %v793 = vld [vmem:[%s4 + $0x10] sm:$0xff]
    %v794 = vld [vmem:[%s4 + $0x18] sm:$0xff]
    %v795 = vld [vmem:[%s4 + $0x20] sm:$0xff]
    %v796 = vld [vmem:[%s4 + $0x28] sm:$0xff]
    %v797 = vld [vmem:[%s4 + $0x30] sm:$0xff]
    %v798 = vld [vmem:[%s4 + $0x38] sm:$0xff]
    %v799 = vld [vmem:[%s5] sm:$0x1]
    %v801 = vlaneseq
    %v802 = vshrl.u32 %v801, 7
    %v803 = vsub.s32 0, %v802
    %v804 = vrot.slane %v799, %v803
    %v807 = vsel %vm88, %v790, 0
    %809 = vmatprep.subr.mxu0 0.0
    %810 = vmatpush1.msra.mxu0 %v791
    %811 = vmatprep.subr.mxu0 0.0
    %812 = vmatpush1.msra.mxu0 %v792
    %813 = vmatprep.subr.mxu0 0.0
    %814 = vmatpush1.msra.mxu0 %v793
    %815 = vmatprep.subr.mxu0 0.0
    %816 = vmatpush1.msra.mxu0 %v794
    %817 = vmatprep.subr.mxu0 0.0
    %818 = vmatpush1.msra.mxu0 %v795
    %819 = vmatprep.subr.mxu0 0.0
    %820 = vmatpush1.msra.mxu0 %v796
    %821 = vmatprep.subr.mxu0 0.0
    %822 = vmatpush1.msra.mxu0 %v797
    %823 = vmatprep.subr.mxu0 0.0
    %824 = vmatpush1.msra.mxu0 %v798
    %825 = vmatprep.subr.mxu0 0.0
    %826 = vmatpush1.msra.mxu0 0.0
    %827 = vmatprep.subr.mxu0 0.0
    %828 = vmatpush1.msra.mxu0 0.0
    %829 = vmatprep.subr.mxu0 0.0
    %830 = vmatpush1.msra.mxu0 0.0
    %831 = vmatprep.subr.mxu0 0.0
    %832 = vmatpush1.msra.mxu0 0.0
    %833 = vmatprep.subr.mxu0 0.0
    %834 = vmatpush1.msra.mxu0 0.0
    %835 = vmatprep.subr.mxu0 0.0
    %836 = vmatpush1.msra.mxu0 0.0
    %837 = vmatprep.subr.mxu0 0.0
    %838 = vmatpush1.msra.mxu0 0.0
    %839 = vmatprep.subr.mxu0 0.0
    %840 = vmatpush1.msra.mxu0 0.0
    %841 = vmatprep.subr.mxu0 0.0
    %842 = vmatpush1.msra.mxu0 0.0
    %843 = vmatprep.subr.mxu0 0.0
    %844 = vmatpush1.msra.mxu0 0.0
    %845 = vmatprep.subr.mxu0 0.0
    %846 = vmatpush1.msra.mxu0 0.0
    %847 = vmatprep.subr.mxu0 0.0
    %848 = vmatpush1.msra.mxu0 0.0
    %849 = vmatprep.subr.mxu0 0.0
    %850 = vmatpush1.msra.mxu0 0.0
    %851 = vmatprep.subr.mxu0 0.0
    %852 = vmatpush1.msra.mxu0 0.0
    %853 = vmatprep.subr.mxu0 0.0
    %854 = vmatpush1.msra.mxu0 0.0
    %855 = vmatprep.subr.mxu0 0.0
    %856 = vmatpush1.msra.mxu0 0.0
    %857 = vmatprep.subr.mxu0 0.0
    %858 = vmatpush1.msra.mxu0 0.0
    %859 = vmatprep.subr.mxu0 0.0
    %860 = vmatpush1.msra.mxu0 0.0
    %861 = vmatprep.subr.mxu0 0.0
    %862 = vmatpush1.msra.mxu0 0.0
    %863 = vmatprep.subr.mxu0 0.0
    %864 = vmatpush1.msra.mxu0 0.0
    %865 = vmatprep.subr.mxu0 0.0
    %866 = vmatpush1.msra.mxu0 0.0
    %867 = vmatprep.subr.mxu0 0.0
    %868 = vmatpush1.msra.mxu0 0.0
    %869 = vmatprep.subr.mxu0 0.0
    %870 = vmatpush1.msra.mxu0 0.0
    %871 = vmatprep.subr.mxu0 0.0
    %872 = vmatpush1.msra.mxu0 0.0
    %873 = vmatprep.mubr.f32.mxu0 0.0
    %874 = vmatmul.mubr.f32.gmra.mrb[0].mxu0 %v807
    %v875 = vpop.f32.mrb[0].mxu0
    %v876 = vadd.f32 %v804, %v875
    %v877 = vpop.f32.mrb[0].mxu0
    %878 = vdwg.mxu0
    %vm879 = vcmask 33792
    %880 = vst.msk [vmem:[#allocation2] sm:$0x3] %vm879, %v876
    // Predicated region
    $region26: #{bilstm_1_forward.1} parent=1 // pred_check
      _
    $region27: #{bilstm_1_forward.1} parent=1 // pred_check_branch
      %882 = sbr.rel (0) target = $region29
    $region28: #{bilstm_1_forward.1} parent=1 // pred_region
      %s884 = ssub.s32 32, 32
      %885 = vsyncadd [#allocation3], %s884
      %s887 = sshll.u32 [#allocation2], 4
      %s888 = int_to_ptr.vmem [resolvable:$true] %s887
      %890 = dma.vmem_to_hbm [thread:$0]  %s888, 32, %s6, [#allocation3]
    $region29: #{bilstm_1_forward.1} parent=1 // pred_fallthru
      _
    // Predicated region
    $region30: #{bilstm_1_forward.1} parent=1 // pred_check
      _
    $region31: #{bilstm_1_forward.1} parent=1 // pred_check_branch
      %892 = sbr.rel (0) target = $region33
    $region32: #{bilstm_1_forward.1} parent=1 // pred_region
      %893 = dma.done [#allocation3], 32
    $region33: #{bilstm_1_forward.1} parent=1 // pred_fallthru
      _
    %894 = vsyncpa [#allocation3], 1

</llo_original>
